<compile_context>
chip_gen: v7x
topology: tpu7x:2x2x1
jax: 0.10.0
libtpu: 0.0.40
codegen_flags: <defaults>
</compile_context>

<pallas_src>
import functools

import jax
import jax.numpy as jnp
from jax.experimental import pallas as pl
from jax.experimental.pallas import tpu as pltpu

_LANE = 128
_SUBLANE = 8


def _round_up(v, m):
    return -(-v // m) * m


def _ganloss_kernel(x_ref, y_ref, o_ref, acc_ref, *, total_n):
    i = pl.program_id(0)

    @pl.when(i == 0)
    def _():
        acc_ref[...] = jnp.zeros_like(acc_ref)

    # Widening cast in-kernel (hidden under the DMA); inputs stream native dtype.
    x = x_ref[...].astype(jnp.float32)
    y = y_ref[...].astype(jnp.float32)

    # (row_tile, 128) -> (row_tile//8, 8, 128): summing over the leading (major)
    # axis is just vreg-wise VPU adds — no cross-lane/XLU work per step.
    xf = x.reshape(-1, _SUBLANE, _LANE)
    yf = y.reshape(-1, _SUBLANE, _LANE)

    acc_ref[0] += jnp.sum(xf, axis=0)            # sum(x)
    acc_ref[1] += jnp.sum(xf * xf, axis=0)       # sum(x*x)
    acc_ref[2] += jnp.sum(yf, axis=0)            # sum(y)
    acc_ref[3] += jnp.sum(yf * yf, axis=0)       # sum(y*y)

    @pl.when(i == pl.num_programs(0) - 1)
    def _():
        n = jnp.float32(total_n)
        sx = jnp.sum(acc_ref[0])
        qx = jnp.sum(acc_ref[1])
        sy = jnp.sum(acc_ref[2])
        qy = jnp.sum(acc_ref[3])
        # lsgan_x = mean((x - mean(y) - 1)^2) ; target = real_label (ones)
        c_x = sy / n + jnp.float32(1.0)
        lsgan_x = (qx - 2.0 * c_x * sx + n * c_x * c_x) / n
        # lsgan_y = mean((y - mean(x) - 0)^2) ; target = fake_label (zeros)
        c_y = sx / n
        lsgan_y = (qy - 2.0 * c_y * sy + n * c_y * c_y) / n
        o_ref[0, 0] = (lsgan_x + lsgan_y) * jnp.float32(0.5)


def gan_loss(pred_x, pred_y, *, row_tile=1024):
    """Relativistic LSGAN loss (GANLoss.forward) as a single Pallas reduction."""
    assert pred_x.shape == pred_y.shape
    total_n = int(pred_x.size)
    assert total_n > 0

    rows = _round_up(total_n, _LANE) // _LANE
    # Row-tile: multiple of 16 (bf16 sublane packing safe), capped at input size.
    rt = min(_round_up(row_tile, 16), _round_up(rows, 16))
    padded_rows = _round_up(rows, rt)
    pad = padded_rows * _LANE - total_n

    def to_slab(p):
        flat = p.reshape(-1)  # keep native dtype — no wrapper upcast
        if pad:
            flat = jnp.pad(flat, (0, pad))
        return flat.reshape(padded_rows, _LANE)

    x2d = to_slab(pred_x)
    y2d = to_slab(pred_y)

    kernel = functools.partial(_ganloss_kernel, total_n=total_n)

    out = pl.pallas_call(
        kernel,
        out_shape=jax.ShapeDtypeStruct((1, 1), jnp.float32),
        grid_spec=pltpu.PrefetchScalarGridSpec(
            num_scalar_prefetch=0,
            grid=(padded_rows // rt,),
            in_specs=[
                pl.BlockSpec((rt, _LANE), lambda i: (i, 0)),
                pl.BlockSpec((rt, _LANE), lambda i: (i, 0)),
            ],
            out_specs=pl.BlockSpec(memory_space=pltpu.SMEM),
            scratch_shapes=[pltpu.VMEM((4, _SUBLANE, _LANE), jnp.float32)],
        ),
        compiler_params=pltpu.CompilerParams(
            dimension_semantics=("arbitrary",),
        ),
    )(x2d, y2d)
    return out[0, 0]


def gan_loss_ref(pred_x, pred_y):
    """Pure-JAX reference mirroring the PyTorch module."""
    prediction_size = pred_x.shape
    real_label = jnp.ones(prediction_size, jnp.float32)   # LsganLoss.real_label buffer
    fake_label = jnp.zeros(prediction_size, jnp.float32)  # LsganLoss.fake_label buffer
    l_r_x = pred_x - jnp.mean(pred_y)
    l_r_y = pred_y - jnp.mean(pred_x)
    lsgan_x = jnp.mean((l_r_x - real_label) ** 2)
    lsgan_y = jnp.mean((l_r_y - fake_label) ** 2)
    return (lsgan_x + lsgan_y) / 2


if __name__ == "__main__":
    key = jax.random.PRNGKey(0)
    kx, ky, kx2, ky2 = jax.random.split(key, 4)

    # Discriminator-style predictions, NCHW: (batch=2, channels=4, 16, 16).
    pred_x = jax.random.normal(kx, (2, 4, 16, 16), dtype=jnp.float32)
    pred_y = jax.random.normal(ky, (2, 4, 16, 16), dtype=jnp.float32)
    loss = jax.block_until_ready(gan_loss(pred_x, pred_y))
    ref = jax.block_until_ready(gan_loss_ref(pred_x, pred_y))
    assert jnp.allclose(loss, ref, rtol=1e-4, atol=1e-5), (loss, ref)

    # Non-128-divisible element count: exercises the zero-padding path.
    px2 = jax.random.normal(kx2, (2, 3, 30, 30), dtype=jnp.float32)
    py2 = jax.random.normal(ky2, (2, 3, 30, 30), dtype=jnp.float32)
    loss2 = jax.block_until_ready(gan_loss(px2, py2))
    ref2 = jax.block_until_ready(gan_loss_ref(px2, py2))
    assert jnp.allclose(loss2, ref2, rtol=1e-4, atol=1e-5), (loss2, ref2)

    print("KERNEL_OK")
</pallas_src>

<mosaic_0001>
module attributes {stable_mosaic.version = 11 : i64} {
  func.func @_ganloss_kernel(%arg0: i32, %arg1: memref<16x128xf32, #tpu.memory_space<vmem>>, %arg2: memref<16x128xf32, #tpu.memory_space<vmem>>, %arg3: memref<1x1xf32, #tpu.memory_space<smem>>, %arg4: memref<4x8x128xf32, #tpu.memory_space<vmem>>) attributes {dimension_semantics = [#tpu.dimension_semantics<arbitrary>], iteration_bounds = array<i64: 1>, scalar_prefetch = 0 : i64, scratch_operands = 1 : i64, tpu.core_type = #tpu.core_type<tc>, window_params = [{transform_indices = @transform_0, window_bounds = array<i64: 16, 128>}, {transform_indices = @transform_1, window_bounds = array<i64: 16, 128>}, {transform_indices = @transform_2, window_bounds = array<i64: 1, 1>}]} {
    %c0_i32 = arith.constant 0 : i32
    %0 = arith.cmpi eq, %arg0, %c0_i32 : i32
    %1 = arith.extui %0 : i1 to i32
    %c0_i32_0 = arith.constant 0 : i32
    %2 = arith.cmpi ne, %1, %c0_i32_0 : i32
    scf.if %2 {
      %cst_30 = arith.constant 0.000000e+00 : f32
      %40 = vector.broadcast %cst_30 : f32 to vector<4x8x128xf32>
      %c0_31 = arith.constant 0 : index
      %c0_32 = arith.constant 0 : index
      %c0_33 = arith.constant 0 : index
      %41 = vector.load %arg4[%c0_31, %c0_32, %c0_33] : memref<4x8x128xf32, #tpu.memory_space<vmem>>, vector<4x8x128xf32>
      tpu.vector_store %arg4[%c0_31, %c0_32, %c0_33], %40 {strides = array<i32>} : memref<4x8x128xf32, #tpu.memory_space<vmem>>, vector<4x8x128xf32>,
    } else {
    }
    %c0 = arith.constant 0 : index
    %c0_1 = arith.constant 0 : index
    %3 = vector.load %arg1[%c0, %c0_1] : memref<16x128xf32, #tpu.memory_space<vmem>>, vector<16x128xf32>
    %c0_2 = arith.constant 0 : index
    %c0_3 = arith.constant 0 : index
    %4 = vector.load %arg2[%c0_2, %c0_3] : memref<16x128xf32, #tpu.memory_space<vmem>>, vector<16x128xf32>
    %5 = vector.shape_cast %3 : vector<16x128xf32> to vector<2x8x128xf32>
    %6 = vector.shape_cast %4 : vector<16x128xf32> to vector<2x8x128xf32>
    %c0_4 = arith.constant 0 : index
    %c0_5 = arith.constant 0 : index
    %c0_6 = arith.constant 0 : index
    %7 = vector.load %arg4[%c0_4, %c0_5, %c0_6] : memref<4x8x128xf32, #tpu.memory_space<vmem>>, vector<1x8x128xf32>
    %8 = vector.shape_cast %7 : vector<1x8x128xf32> to vector<8x128xf32>
    %cst = arith.constant dense<0.000000e+00> : vector<8x128xf32>
    %9 = vector.multi_reduction <add>, %5, %cst [0] : vector<2x8x128xf32> to vector<8x128xf32>
    %10 = arith.addf %8, %9 : vector<8x128xf32>
    %c0_7 = arith.constant 0 : index
    %c0_8 = arith.constant 0 : index
    %c0_9 = arith.constant 0 : index
    %11 = vector.load %arg4[%c0_7, %c0_8, %c0_9] : memref<4x8x128xf32, #tpu.memory_space<vmem>>, vector<1x8x128xf32>
    %12 = vector.shape_cast %11 : vector<1x8x128xf32> to vector<8x128xf32>
    %13 = vector.shape_cast %10 : vector<8x128xf32> to vector<1x8x128xf32>
    tpu.vector_store %arg4[%c0_7, %c0_8, %c0_9], %13 {strides = array<i32>} : memref<4x8x128xf32, #tpu.memory_space<vmem>>, vector<1x8x128xf32>,
    %c1 = arith.constant 1 : index
    %c0_10 = arith.constant 0 : index
    %c0_11 = arith.constant 0 : index
    %14 = vector.load %arg4[%c1, %c0_10, %c0_11] : memref<4x8x128xf32, #tpu.memory_space<vmem>>, vector<1x8x128xf32>
    %15 = vector.shape_cast %14 : vector<1x8x128xf32> to vector<8x128xf32>
    %16 = arith.mulf %5, %5 : vector<2x8x128xf32>
    %cst_12 = arith.constant dense<0.000000e+00> : vector<8x128xf32>
    %17 = vector.multi_reduction <add>, %16, %cst_12 [0] : vector<2x8x128xf32> to vector<8x128xf32>
    %18 = arith.addf %15, %17 : vector<8x128xf32>
    %c1_13 = arith.constant 1 : index
    %c0_14 = arith.constant 0 : index
    %c0_15 = arith.constant 0 : index
    %19 = vector.load %arg4[%c1_13, %c0_14, %c0_15] : memref<4x8x128xf32, #tpu.memory_space<vmem>>, vector<1x8x128xf32>
    %20 = vector.shape_cast %19 : vector<1x8x128xf32> to vector<8x128xf32>
    %21 = vector.shape_cast %18 : vector<8x128xf32> to vector<1x8x128xf32>
    tpu.vector_store %arg4[%c1_13, %c0_14, %c0_15], %21 {strides = array<i32>} : memref<4x8x128xf32, #tpu.memory_space<vmem>>, vector<1x8x128xf32>,
    %c2 = arith.constant 2 : index
    %c0_16 = arith.constant 0 : index
    %c0_17 = arith.constant 0 : index
    %22 = vector.load %arg4[%c2, %c0_16, %c0_17] : memref<4x8x128xf32, #tpu.memory_space<vmem>>, vector<1x8x128xf32>
    %23 = vector.shape_cast %22 : vector<1x8x128xf32> to vector<8x128xf32>
    %cst_18 = arith.constant dense<0.000000e+00> : vector<8x128xf32>
    %24 = vector.multi_reduction <add>, %6, %cst_18 [0] : vector<2x8x128xf32> to vector<8x128xf32>
    %25 = arith.addf %23, %24 : vector<8x128xf32>
    %c2_19 = arith.constant 2 : index
    %c0_20 = arith.constant 0 : index
    %c0_21 = arith.constant 0 : index
    %26 = vector.load %arg4[%c2_19, %c0_20, %c0_21] : memref<4x8x128xf32, #tpu.memory_space<vmem>>, vector<1x8x128xf32>
    %27 = vector.shape_cast %26 : vector<1x8x128xf32> to vector<8x128xf32>
    %28 = vector.shape_cast %25 : vector<8x128xf32> to vector<1x8x128xf32>
    tpu.vector_store %arg4[%c2_19, %c0_20, %c0_21], %28 {strides = array<i32>} : memref<4x8x128xf32, #tpu.memory_space<vmem>>, vector<1x8x128xf32>,
    %c3 = arith.constant 3 : index
    %c0_22 = arith.constant 0 : index
    %c0_23 = arith.constant 0 : index
    %29 = vector.load %arg4[%c3, %c0_22, %c0_23] : memref<4x8x128xf32, #tpu.memory_space<vmem>>, vector<1x8x128xf32>
    %30 = vector.shape_cast %29 : vector<1x8x128xf32> to vector<8x128xf32>
    %31 = arith.mulf %6, %6 : vector<2x8x128xf32>
    %cst_24 = arith.constant dense<0.000000e+00> : vector<8x128xf32>
    %32 = vector.multi_reduction <add>, %31, %cst_24 [0] : vector<2x8x128xf32> to vector<8x128xf32>
    %33 = arith.addf %30, %32 : vector<8x128xf32>
    %c3_25 = arith.constant 3 : index
    %c0_26 = arith.constant 0 : index
    %c0_27 = arith.constant 0 : index
    %34 = vector.load %arg4[%c3_25, %c0_26, %c0_27] : memref<4x8x128xf32, #tpu.memory_space<vmem>>, vector<1x8x128xf32>
    %35 = vector.shape_cast %34 : vector<1x8x128xf32> to vector<8x128xf32>
    %36 = vector.shape_cast %33 : vector<8x128xf32> to vector<1x8x128xf32>
    tpu.vector_store %arg4[%c3_25, %c0_26, %c0_27], %36 {strides = array<i32>} : memref<4x8x128xf32, #tpu.memory_space<vmem>>, vector<1x8x128xf32>,
    %c0_i32_28 = arith.constant 0 : i32
    %37 = arith.cmpi eq, %arg0, %c0_i32_28 : i32
    %38 = arith.extui %37 : i1 to i32
    %c0_i32_29 = arith.constant 0 : i32
    %39 = arith.cmpi ne, %38, %c0_i32_29 : i32
    scf.if %39 {
      %c0_30 = arith.constant 0 : index
      %c0_31 = arith.constant 0 : index
      %c0_32 = arith.constant 0 : index
      %40 = vector.load %arg4[%c0_30, %c0_31, %c0_32] : memref<4x8x128xf32, #tpu.memory_space<vmem>>, vector<1x8x128xf32>
      %41 = vector.shape_cast %40 : vector<1x8x128xf32> to vector<8x128xf32>
      %42 = vector.shape_cast %41 : vector<8x128xf32> to vector<1x8x128xf32>
      %cst_33 = arith.constant dense<0.000000e+00> : vector<1xf32>
      %43 = vector.multi_reduction <add>, %42, %cst_33 [1, 2] : vector<1x8x128xf32> to vector<1xf32>
      %44 = vector.shape_cast %43 : vector<1xf32> to vector<1x1x1xf32>
      %45 = vector.extract %44[0, 0, 0] : f32 from vector<1x1x1xf32>
      %c1_34 = arith.constant 1 : index
      %c0_35 = arith.constant 0 : index
      %c0_36 = arith.constant 0 : index
      %46 = vector.load %arg4[%c1_34, %c0_35, %c0_36] : memref<4x8x128xf32, #tpu.memory_space<vmem>>, vector<1x8x128xf32>
      %47 = vector.shape_cast %46 : vector<1x8x128xf32> to vector<8x128xf32>
      %48 = vector.shape_cast %47 : vector<8x128xf32> to vector<1x8x128xf32>
      %cst_37 = arith.constant dense<0.000000e+00> : vector<1xf32>
      %49 = vector.multi_reduction <add>, %48, %cst_37 [1, 2] : vector<1x8x128xf32> to vector<1xf32>
      %50 = vector.shape_cast %49 : vector<1xf32> to vector<1x1x1xf32>
      %51 = vector.extract %50[0, 0, 0] : f32 from vector<1x1x1xf32>
      %c2_38 = arith.constant 2 : index
      %c0_39 = arith.constant 0 : index
      %c0_40 = arith.constant 0 : index
      %52 = vector.load %arg4[%c2_38, %c0_39, %c0_40] : memref<4x8x128xf32, #tpu.memory_space<vmem>>, vector<1x8x128xf32>
      %53 = vector.shape_cast %52 : vector<1x8x128xf32> to vector<8x128xf32>
      %54 = vector.shape_cast %53 : vector<8x128xf32> to vector<1x8x128xf32>
      %cst_41 = arith.constant dense<0.000000e+00> : vector<1xf32>
      %55 = vector.multi_reduction <add>, %54, %cst_41 [1, 2] : vector<1x8x128xf32> to vector<1xf32>
      %56 = vector.shape_cast %55 : vector<1xf32> to vector<1x1x1xf32>
      %57 = vector.extract %56[0, 0, 0] : f32 from vector<1x1x1xf32>
      %c3_42 = arith.constant 3 : index
      %c0_43 = arith.constant 0 : index
      %c0_44 = arith.constant 0 : index
      %58 = vector.load %arg4[%c3_42, %c0_43, %c0_44] : memref<4x8x128xf32, #tpu.memory_space<vmem>>, vector<1x8x128xf32>
      %59 = vector.shape_cast %58 : vector<1x8x128xf32> to vector<8x128xf32>
      %60 = vector.shape_cast %59 : vector<8x128xf32> to vector<1x8x128xf32>
      %cst_45 = arith.constant dense<0.000000e+00> : vector<1xf32>
      %61 = vector.multi_reduction <add>, %60, %cst_45 [1, 2] : vector<1x8x128xf32> to vector<1xf32>
      %62 = vector.shape_cast %61 : vector<1xf32> to vector<1x1x1xf32>
      %63 = vector.extract %62[0, 0, 0] : f32 from vector<1x1x1xf32>
      %cst_46 = arith.constant 2.048000e+03 : f32
      %64 = arith.divf %57, %cst_46 : f32
      %cst_47 = arith.constant 1.000000e+00 : f32
      %65 = arith.addf %64, %cst_47 : f32
      %cst_48 = arith.constant 2.000000e+00 : f32
      %66 = arith.mulf %cst_48, %65 : f32
      %67 = arith.mulf %66, %45 : f32
      %68 = arith.subf %51, %67 : f32
      %cst_49 = arith.constant 2.048000e+03 : f32
      %69 = arith.mulf %cst_49, %65 : f32
      %70 = arith.mulf %69, %65 : f32
      %71 = arith.addf %68, %70 : f32
      %cst_50 = arith.constant 2.048000e+03 : f32
      %72 = arith.divf %71, %cst_50 : f32
      %cst_51 = arith.constant 2.048000e+03 : f32
      %73 = arith.divf %45, %cst_51 : f32
      %cst_52 = arith.constant 2.000000e+00 : f32
      %74 = arith.mulf %cst_52, %73 : f32
      %75 = arith.mulf %74, %57 : f32
      %76 = arith.subf %63, %75 : f32
      %cst_53 = arith.constant 2.048000e+03 : f32
      %77 = arith.mulf %cst_53, %73 : f32
      %78 = arith.mulf %77, %73 : f32
      %79 = arith.addf %76, %78 : f32
      %cst_54 = arith.constant 2.048000e+03 : f32
      %80 = arith.divf %79, %cst_54 : f32
      %81 = arith.addf %72, %80 : f32
      %cst_55 = arith.constant 5.000000e-01 : f32
      %82 = arith.mulf %81, %cst_55 : f32
      %c0_56 = arith.constant 0 : index
      %c0_57 = arith.constant 0 : index
      %83 = memref.load %arg3[%c0_56, %c0_57] : memref<1x1xf32, #tpu.memory_space<smem>>
      memref.store %82, %arg3[%c0_56, %c0_57] : memref<1x1xf32, #tpu.memory_space<smem>>
    } else {
    }
    return
  }
  func.func @transform_0(%arg0: i32) -> (i32, i32) {
    %c0_i32 = arith.constant 0 : i32
    %c0_i32_0 = arith.constant 0 : i32
    return %arg0, %c0_i32 : i32, i32
  }
  func.func @transform_1(%arg0: i32) -> (i32, i32) {
    %c0_i32 = arith.constant 0 : i32
    %c0_i32_0 = arith.constant 0 : i32
    return %arg0, %c0_i32 : i32, i32
  }
  func.func @transform_2(%arg0: i32) -> (i32, i32) {
    %c0_i32 = arith.constant 0 : i32
    %c0_i32_0 = arith.constant 0 : i32
    %c0_i32_1 = arith.constant 0 : i32
    return %c0_i32, %c0_i32_0 : i32, i32
  }
}

</mosaic_0001>

<llo_original>
// kernel: tpu_custom_call.1
$region0: #{tpu_custom_call.1}
  #allocation0 [shape = 'u32[]', space=smem, size = 0x4, offset = 0x4, fixed_abs, tag = 'smem constant byte address 0x4 - core index']
  #allocation1 [shape = 'u32[144,128]{1,0:T(1,128)}', space=vmem, size = 0x12000, scoped, tag = 'internal scratch']
  #allocation2 [shape = 'f32[4,8,128]{2,1,0:T(8,128)}', space=vmem, size = 0x4000, scoped, tag = 'scratch operand']
  %s0 = inlined_call_operand.hbm [shape: f32[16,128], index: 0, kind: input, shape index: {}]
  %s1 = inlined_call_operand.hbm [shape: f32[16,128], index: 1, kind: input, shape index: {}]
  %s2 = inlined_call_operand.hbm [shape: f32[1,1], index: 2, kind: output, shape index: {}]
  %s3 = sld [smem:[#allocation0]]
  $region34: #{tpu_custom_call.1} parent=0
    _
  %s5 = ssub.s32 1, %s3
  %s6 = scalar_select 0, %s5, %s3
  $region1: #{tpu_custom_call.1} parent=0
    #allocation3 [shape = 'u8[8192]{0}', space=vmem, size = 0x2000, scoped, tag = 'input window, operand 0, single buffered']
    #allocation4 [shape = 's32[1]{0}', space=sflag, size = 0x4, scoped, tag = 'scoped memory for tpu_custom_call.1']
    #allocation5 [shape = 's32[1]{0}', space=sflag, size = 0x4, scoped, tag = 'scoped memory for tpu_custom_call.1']
    #allocation6 [shape = 'u8[8192]{0}', space=vmem, size = 0x2000, scoped, tag = 'input window, operand 1, single buffered']
    #allocation7 [shape = 's32[1]{0}', space=sflag, size = 0x4, scoped, tag = 'scoped memory for tpu_custom_call.1']
    #allocation8 [shape = 'u8[512]{0}', space=smem, size = 0x200, scoped, tag = 'output window, operand 0, single buffered']
    %7 = vsyncpa [#allocation4], 0
    %8 = vsyncpa [#allocation7], 0
    %9 = vsyncpa [#allocation5], 0
    // Predicated region
    $region2: #{tpu_custom_call.1} parent=1 // pred_check
      _
    $region3: #{tpu_custom_call.1} parent=1 // pred_check_branch
      %11 = sbr.rel (0) target = $region5
    $region4: #{tpu_custom_call.1} parent=1 // pred_region
      %s13 = ssub.s32 256, 256
      %14 = vsyncadd [#allocation4], %s13
      %s15 = sshll.u32 [#allocation3], 4
      %s16 = int_to_ptr.vmem [resolvable:$true] %s15
      %21 = dma.hbm_to_vmem [thread:$0]  %s0, 256, %s16, [#allocation4], 128, 128, 8
    $region5: #{tpu_custom_call.1} parent=1 // pred_fallthru
      _
    // Predicated region
    $region6: #{tpu_custom_call.1} parent=1 // pred_check
      _
    $region7: #{tpu_custom_call.1} parent=1 // pred_check_branch
      %23 = sbr.rel (0) target = $region9
    $region8: #{tpu_custom_call.1} parent=1 // pred_region
      %s25 = ssub.s32 256, 256
      %26 = vsyncadd [#allocation7], %s25
      %s27 = sshll.u32 [#allocation6], 4
      %s28 = int_to_ptr.vmem [resolvable:$true] %s27
      %33 = dma.hbm_to_vmem [thread:$0]  %s1, 256, %s28, [#allocation7], 128, 128, 8
    $region9: #{tpu_custom_call.1} parent=1 // pred_fallthru
      _
    // Predicated region
    $region10: #{tpu_custom_call.1} parent=1 // pred_check
      _
    $region11: #{tpu_custom_call.1} parent=1 // pred_check_branch
      %35 = sbr.rel (0) target = $region13
    $region12: #{tpu_custom_call.1} parent=1 // pred_region
      %36 = dma.done [#allocation4], 256
    $region13: #{tpu_custom_call.1} parent=1 // pred_fallthru
      _
    // Predicated region
    $region14: #{tpu_custom_call.1} parent=1 // pred_check
      _
    $region15: #{tpu_custom_call.1} parent=1 // pred_check_branch
      %38 = sbr.rel (0) target = $region17
    $region16: #{tpu_custom_call.1} parent=1 // pred_region
      %39 = dma.done [#allocation7], 256
    $region17: #{tpu_custom_call.1} parent=1 // pred_fallthru
      _
    %p40 = scmp.eq.s32.totalorder 0, 0
    // Predicated region
    $region18: #{tpu_custom_call.1} parent=1 // pred_check
      %p41 = pneg %p40
    $region19: #{tpu_custom_call.1} parent=1 // pred_check_branch
      %43 = sbr.rel (%p41) target = $region21
    $region20: #{tpu_custom_call.1} parent=1 // pred_region
      %44 = vst [vmem:[#allocation2] sm:$0xff] 0.0
      %45 = vst [vmem:[#allocation2 + $0x8] sm:$0xff] 0.0
      %46 = vst [vmem:[#allocation2 + $0x10] sm:$0xff] 0.0
      %47 = vst [vmem:[#allocation2 + $0x18] sm:$0xff] 0.0
    $region21: #{tpu_custom_call.1} parent=1 // pred_fallthru
      _
    %v48 = vld [vmem:[#allocation3] sm:$0xff]
    %v49 = vld [vmem:[#allocation3 + $0x8] sm:$0xff]
    %v50 = vld [vmem:[#allocation6] sm:$0xff]
    %v51 = vld [vmem:[#allocation6 + $0x8] sm:$0xff]
    %v52 = vld [vmem:[#allocation2] sm:$0xff]
    %v53 = vadd.f32 %v48, %v49
    %v54 = vadd.f32 %v52, %v53
    %55 = vst [vmem:[#allocation2] sm:$0xff] %v54
    %s56 = scalar_lea.vmem [#allocation2], 8
    %v57 = vld [vmem:[%s56] sm:$0xff]
    %v58 = vmul.f32 %v48, %v48
    %v59 = vmul.f32 %v49, %v49
    %v60 = vadd.f32 %v58, %v59
    %v61 = vadd.f32 %v57, %v60
    %62 = vst [vmem:[%s56] sm:$0xff] %v61
    %s63 = scalar_lea.vmem [#allocation2], 16
    %v64 = vld [vmem:[%s63] sm:$0xff]
    %v65 = vadd.f32 %v50, %v51
    %v66 = vadd.f32 %v64, %v65
    %67 = vst [vmem:[%s63] sm:$0xff] %v66
    %s68 = scalar_lea.vmem [#allocation2], 24
    %v69 = vld [vmem:[%s68] sm:$0xff]
    %v70 = vmul.f32 %v50, %v50
    %v71 = vmul.f32 %v51, %v51
    %v72 = vadd.f32 %v70, %v71
    %v73 = vadd.f32 %v69, %v72
    %74 = vst [vmem:[%s68] sm:$0xff] %v73
    // Predicated region
    $region22: #{tpu_custom_call.1} parent=1 // pred_check
      %p75 = pneg %p40
    $region23: #{tpu_custom_call.1} parent=1 // pred_check_branch
      %77 = sbr.rel (%p75) target = $region25
    $region24: #{tpu_custom_call.1} parent=1 // pred_region
      %v78 = vld [vmem:[#allocation2] sm:$0xff]
      %79 = vadd.xlane.f32.xlu0 %v78
      %v80 = vpop.xlane.xlu0 %79
      %v81 = vrot.slane %v80, 4
      %v82 = vadd.f32 %v80, %v81
      %v83 = vrot.slane %v82, 2
      %v84 = vadd.f32 %v82, %v83
      %v85 = vrot.slane %v84, 1
      %v86 = vadd.f32 %v84, %v85
      %s87 = vtos %v86
      %v88 = vld [vmem:[%s56] sm:$0xff]
      %89 = vadd.xlane.f32.xlu0 %v88
      %v90 = vpop.xlane.xlu0 %89
      %v91 = vrot.slane %v90, 4
      %v92 = vadd.f32 %v90, %v91
      %v93 = vrot.slane %v92, 2
      %v94 = vadd.f32 %v92, %v93
      %v95 = vrot.slane %v94, 1
      %v96 = vadd.f32 %v94, %v95
      %s97 = vtos %v96
      %v98 = vld [vmem:[%s63] sm:$0xff]
      %99 = vadd.xlane.f32.xlu0 %v98
      %v100 = vpop.xlane.xlu0 %99
      %v101 = vrot.slane %v100, 4
      %v102 = vadd.f32 %v100, %v101
      %v103 = vrot.slane %v102, 2
      %v104 = vadd.f32 %v102, %v103
      %v105 = vrot.slane %v104, 1
      %v106 = vadd.f32 %v104, %v105
      %s107 = vtos %v106
      %v108 = vld [vmem:[%s68] sm:$0xff]
      %109 = vadd.xlane.f32.xlu0 %v108
      %v110 = vpop.xlane.xlu0 %109
      %v111 = vrot.slane %v110, 4
      %v112 = vadd.f32 %v110, %v111
      %v113 = vrot.slane %v112, 2
      %v114 = vadd.f32 %v112, %v113
      %v115 = vrot.slane %v114, 1
      %v116 = vadd.f32 %v114, %v115
      %s117 = vtos %v116
      %v118 = vrcp.pop 2048.0
      %s119 = vtos %v118
      %s120 = smul.f32 %s107, %s119
      %s121 = sadd.f32 %s120, 1.0
      %s122 = smul.f32 %s121, 2.0
      %s123 = smul.f32 %s122, %s87
      %s124 = ssub.f32 %s97, %s123
      %s125 = smul.f32 %s121, 2048.0
      %s126 = smul.f32 %s125, %s121
      %s127 = sadd.f32 %s124, %s126
      %v128 = vrcp.pop 2048.0
      %s129 = vtos %v128
      %s130 = smul.f32 %s127, %s129
      %v131 = vrcp.pop 2048.0
      %s132 = vtos %v131
      %s133 = smul.f32 %s87, %s132
      %s134 = smul.f32 %s133, 2.0
      %s135 = smul.f32 %s134, %s107
      %s136 = ssub.f32 %s117, %s135
      %s137 = smul.f32 %s133, 2048.0
      %s138 = smul.f32 %s137, %s133
      %s139 = sadd.f32 %s136, %s138
      %v140 = vrcp.pop 2048.0
      %s141 = vtos %v140
      %s142 = smul.f32 %s139, %s141
      %s143 = sadd.f32 %s130, %s142
      %s144 = smul.f32 %s143, 0.5
      %s145 = scalar_lea.smem [#allocation8], 0
      %146 = sst [smem:[%s145]] %s144
    $region25: #{tpu_custom_call.1} parent=1 // pred_fallthru
      _
    // Predicated region
    $region26: #{tpu_custom_call.1} parent=1 // pred_check
      _
    $region27: #{tpu_custom_call.1} parent=1 // pred_check_branch
      %148 = sbr.rel (0) target = $region29
    $region28: #{tpu_custom_call.1} parent=1 // pred_region
      %s150 = ssub.s32 16, 16
      %151 = vsyncadd [#allocation5], %s150
      %154 = dma.smem_to_hbm [#allocation8], 16, %s2, [#allocation5]
    $region29: #{tpu_custom_call.1} parent=1 // pred_fallthru
      _
    // Predicated region
    $region30: #{tpu_custom_call.1} parent=1 // pred_check
      _
    $region31: #{tpu_custom_call.1} parent=1 // pred_check_branch
      %156 = sbr.rel (0) target = $region33
    $region32: #{tpu_custom_call.1} parent=1 // pred_region
      %157 = dma.done [#allocation5], 16
    $region33: #{tpu_custom_call.1} parent=1 // pred_fallthru
      _
    %158 = sfence
    %159 = vsyncpa [#allocation4], 1
    %160 = vsyncpa [#allocation7], 1
    %161 = vsyncpa [#allocation5], 1

</llo_original>
